<compile_context>
chip_gen: v7x
topology: tpu7x:2x2x1
jax: 0.10.0
libtpu: 0.0.40
codegen_flags: <defaults>
</compile_context>

<pallas_src>
import functools

import jax
import jax.numpy as jnp
from jax import lax
from jax.experimental import pallas as pl
from jax.experimental.pallas import tpu as pltpu


def _conv_bn_relu_kernel(v_ref, w_ref, shift_ref, o_ref, acc_ref, *,
                         n_htaps, row_step, rows_out, relu):
    # v_ref:     (1, 1, rows_in, K2)        bf16  width-unfolded input depth slab
    # w_ref:     (1, n_htaps, K2, Coutp)    bf16  scale-folded weights for this dz
    # shift_ref: (1, Coutp)                 f32   folded BN shift
    # o_ref:     (1, 1, rows_out, Coutp)          output plane (lane-dense Coutp)
    # acc_ref:   (rows_out, Coutp)          f32   VMEM accumulator
    dz = pl.program_id(2)

    @pl.when(dz == 0)
    def _init():
        acc_ref[...] = jnp.zeros_like(acc_ref)

    # Height taps: short static loop over shifted row windows of the VMEM block.
    contrib = None
    for t in range(n_htaps):
        lhs = v_ref[0, 0, pl.ds(t * row_step, rows_out), :]      # (rows_out, K2) bf16
        part = jnp.dot(lhs, w_ref[0, t],                         # MXU, f32 accumulate
                       preferred_element_type=jnp.float32)
        contrib = part if contrib is None else contrib + part
    acc_ref[...] += contrib

    @pl.when(dz == pl.num_programs(2) - 1)
    def _finalize():
        y = acc_ref[...] + shift_ref[...]                        # folded BN shift
        if relu:
            y = jnp.maximum(y, 0.0)
        o_ref[0, 0] = y.astype(o_ref.dtype)


def basic_conv3d_forward(x_ncdhw, weight, gamma=None, beta=None,
                         running_mean=None, running_var=None, *,
                         bias=None, stride=1, padding=0, eps=1e-5,
                         relu=True, bn=True, out_dtype=None,
                         channels_last_out=False):
    """Forward pass of BasicConv3D (groups=1, dilation=1, eval-mode BN)."""
    N, Cin, D, H, W = x_ncdhw.shape
    Cout, Cin_w, kd, kh, kw = weight.shape
    assert Cin == Cin_w, "groups != 1 not supported"   # TODO(synk): grouped conv
    s, p = int(stride), int(padding)
    Do = (D + 2 * p - kd) // s + 1
    Ho = (H + 2 * p - kh) // s + 1
    Wo = (W + 2 * p - kw) // s + 1
    Dp, Hp = D + 2 * p, H + 2 * p
    if out_dtype is None:
        out_dtype = x_ncdhw.dtype

    # ---- glue: NCDHW -> NDHWC, spatial zero-pad, bf16 (halves glue HBM traffic) ----
    x = jnp.transpose(x_ncdhw, (0, 2, 3, 4, 1)).astype(jnp.bfloat16)
    xp = jnp.pad(x, ((0, 0), (p, p), (p, p), (p, p), (0, 0)))

    # ---- width-only unfold (kw x, NOT the 27x full im2col) ----
    if s == 1:
        # V[n, d, h*Wo + wo, dx*Cin + ci] = xp[n, d, h, wo + dx, ci]
        v = jnp.concatenate([xp[:, :, :, dx:dx + Wo, :] for dx in range(kw)], axis=-1)
        v = v.reshape(N, Dp, Hp * Wo, kw * Cin)
        n_htaps, row_step, k2 = kh, Wo, kw * Cin
        rows_in = Hp * Wo
    else:
        # General stride: unfold H and W (kh*kw x); depth taps stay on the grid.
        slabs = []
        for dy in range(kh):
            for dx in range(kw):
                slabs.append(xp[:, :, dy:dy + s * (Ho - 1) + 1:s,
                                dx:dx + s * (Wo - 1) + 1:s, :])
        v = jnp.concatenate(slabs, axis=-1).reshape(N, Dp, Ho * Wo, kh * kw * Cin)
        n_htaps, row_step, k2 = 1, 0, kh * kw * Cin
        rows_in = Ho * Wo
    rows_out = Ho * Wo

    # ---- fold eval-mode BN (and optional conv bias) into weight scale / shift ----
    if bn:
        scale = (gamma / jnp.sqrt(running_var + eps)).astype(jnp.float32)
        shift = (beta - running_mean * scale).astype(jnp.float32)
    else:
        scale = jnp.ones((Cout,), jnp.float32)
        shift = jnp.zeros((Cout,), jnp.float32)
    if bias is not None:
        shift = shift + scale * bias.astype(jnp.float32)

    # PyTorch (Cout, Cin, kd, kh, kw) -> (kd, kh, kw, Cin, Cout); fold scale in f32.
    w5 = jnp.transpose(weight, (2, 3, 4, 1, 0)).astype(jnp.float32) * scale
    wk = w5.reshape(kd, n_htaps, k2, Cout)

    # ---- pad Cout up to a lane-dense multiple of 128 ----
    coutp = ((Cout + 127) // 128) * 128
    wk = jnp.pad(wk, ((0, 0), (0, 0), (0, 0), (0, coutp - Cout))).astype(jnp.bfloat16)
    shift_p = jnp.pad(shift, (0, coutp - Cout)).reshape(1, coutp).astype(jnp.float32)

    kernel = functools.partial(_conv_bn_relu_kernel, n_htaps=n_htaps,
                               row_step=row_step, rows_out=rows_out, relu=relu)

    out = pl.pallas_call(
        kernel,
        out_shape=jax.ShapeDtypeStruct((N, Do, rows_out, coutp), out_dtype),
        grid_spec=pltpu.PrefetchScalarGridSpec(
            num_scalar_prefetch=0,
            grid=(N, Do, kd),                               # reduction axis last
            in_specs=[
                # one width-unfolded depth slab; depth index = do*stride + dz
                pl.BlockSpec((1, 1, rows_in, k2),
                             lambda n, do, dz: (n, do * s + dz, 0, 0)),
                # scale-folded weight slice for this depth tap
                pl.BlockSpec((1, n_htaps, k2, coutp),
                             lambda n, do, dz: (dz, 0, 0, 0)),
                # folded BN shift (resident)
                pl.BlockSpec((1, coutp), lambda n, do, dz: (0, 0)),
            ],
            out_specs=pl.BlockSpec((1, 1, rows_out, coutp),
                                   lambda n, do, dz: (n, do, 0, 0)),
            scratch_shapes=[pltpu.VMEM((rows_out, coutp), jnp.float32)],
        ),
        compiler_params=pltpu.CompilerParams(
            dimension_semantics=("parallel", "parallel", "arbitrary")),
    )(v, wk, shift_p)

    out = out[:, :, :, :Cout].reshape(N, Do, Ho, Wo, Cout)
    if channels_last_out:
        return out                                   # NDHWC, skips the transpose
    return jnp.transpose(out, (0, 4, 1, 2, 3))       # back to NCDHW


def _reference_bf16(x, weight, gamma, beta, running_mean, running_var, *,
                    stride, padding, eps=1e-5):
    """Reference matching the kernel's bf16 operand rounding (f32 accumulate)."""
    scale = gamma / jnp.sqrt(running_var + eps)
    shift = beta - running_mean * scale
    xb = x.astype(jnp.bfloat16).astype(jnp.float32)
    wb = (weight.astype(jnp.float32) * scale[:, None, None, None, None]
          ).astype(jnp.bfloat16).astype(jnp.float32)
    y = lax.conv_general_dilated(
        xb, wb, window_strides=(stride,) * 3, padding=[(padding, padding)] * 3,
        dimension_numbers=("NCDHW", "OIDHW", "NCDHW"))
    return jnp.maximum(y + shift.reshape(1, -1, 1, 1, 1), 0.0)


def _reference_f32(x, weight, gamma, beta, running_mean, running_var, *,
                   stride, padding, eps=1e-5):
    """Pure f32 module semantics (loose check; kernel feeds the MXU bf16)."""
    y = lax.conv_general_dilated(
        x.astype(jnp.float32), weight.astype(jnp.float32),
        window_strides=(stride,) * 3, padding=[(padding, padding)] * 3,
        dimension_numbers=("NCDHW", "OIDHW", "NCDHW"),
        precision=lax.Precision.HIGHEST)
    sc = (gamma / jnp.sqrt(running_var + eps)).reshape(1, -1, 1, 1, 1)
    sh = (beta - running_mean * gamma / jnp.sqrt(running_var + eps)).reshape(1, -1, 1, 1, 1)
    return jnp.maximum(y * sc + sh, 0.0)


if __name__ == "__main__":
    # Small shapes consistent with the module: in_planes=4, out_planes=8,
    # kernel_size=3, stride=1, padding=1; input (N, C, D, H, W).
    N, Cin, Cout, D, H, W, k = 2, 4, 8, 8, 8, 8, 3
    stride, padding = 1, 1

    key = jax.random.PRNGKey(0)
    kx, kw_, kg, kb, km, kv = jax.random.split(key, 6)
    x = jax.random.normal(kx, (N, Cin, D, H, W), jnp.float32)
    weight = 0.1 * jax.random.normal(kw_, (Cout, Cin, k, k, k), jnp.float32)
    gamma = 1.0 + 0.1 * jax.random.normal(kg, (Cout,), jnp.float32)
    beta = 0.1 * jax.random.normal(kb, (Cout,), jnp.float32)
    running_mean = 0.1 * jax.random.normal(km, (Cout,), jnp.float32)
    running_var = 0.5 + jnp.abs(jax.random.normal(kv, (Cout,), jnp.float32))

    out = basic_conv3d_forward(x, weight, gamma, beta, running_mean, running_var,
                               stride=stride, padding=padding)
    out = jax.block_until_ready(out)

    ref = _reference_bf16(x, weight, gamma, beta, running_mean, running_var,
                          stride=stride, padding=padding)
    assert out.shape == ref.shape == (N, Cout, D, H, W)
    assert jnp.allclose(out, ref, atol=2e-3, rtol=2e-3), "mismatch vs bf16-matched ref"

    ref32 = _reference_f32(x, weight, gamma, beta, running_mean, running_var,
                           stride=stride, padding=padding)
    assert jnp.allclose(out, ref32, atol=1e-1, rtol=1e-1), "mismatch vs f32 ref"
    print("KERNEL_OK")
</pallas_src>

<mosaic_0001>
module attributes {stable_mosaic.version = 11 : i64} {
  func.func @_conv_bn_relu_kernel(%arg0: i32, %arg1: i32, %arg2: i32, %arg3: memref<1x1x80x12xbf16, #tpu.memory_space<vmem>>, %arg4: memref<1x3x12x128xbf16, #tpu.memory_space<vmem>>, %arg5: memref<1x128xf32, #tpu.memory_space<vmem>>, %arg6: memref<1x1x64x128xf32, #tpu.memory_space<vmem>>, %arg7: memref<64x128xf32, #tpu.memory_space<vmem>>) attributes {dimension_semantics = [#tpu.dimension_semantics<parallel>, #tpu.dimension_semantics<parallel>, #tpu.dimension_semantics<arbitrary>], iteration_bounds = array<i64: 2, 8, 3>, scalar_prefetch = 0 : i64, scratch_operands = 1 : i64, tpu.core_type = #tpu.core_type<tc>, window_params = [{transform_indices = @transform_0, window_bounds = array<i64: 1, 1, 80, 12>}, {transform_indices = @transform_1, window_bounds = array<i64: 1, 3, 12, 128>}, {pipeline_mode = #tpu.pipeline_mode<synchronous>, transform_indices = @transform_2, window_bounds = array<i64: 1, 128>}, {transform_indices = @transform_3, window_bounds = array<i64: 1, 1, 64, 128>}]} {
    %c0_i32 = arith.constant 0 : i32
    %0 = arith.cmpi eq, %arg2, %c0_i32 : i32
    %1 = arith.extui %0 : i1 to i32
    %c0_i32_0 = arith.constant 0 : i32
    %2 = arith.cmpi ne, %1, %c0_i32_0 : i32
    scf.if %2 {
      %cst_27 = arith.constant 0.000000e+00 : f32
      %26 = vector.broadcast %cst_27 : f32 to vector<64x128xf32>
      %c0_28 = arith.constant 0 : index
      %c0_29 = arith.constant 0 : index
      %27 = vector.load %arg7[%c0_28, %c0_29] : memref<64x128xf32, #tpu.memory_space<vmem>>, vector<64x128xf32>
      tpu.vector_store %arg7[%c0_28, %c0_29], %26 {strides = array<i32>} : memref<64x128xf32, #tpu.memory_space<vmem>>, vector<64x128xf32>,
    } else {
    }
    %c0 = arith.constant 0 : index
    %c0_1 = arith.constant 0 : index
    %c0_2 = arith.constant 0 : index
    %c0_3 = arith.constant 0 : index
    %3 = vector.load %arg3[%c0, %c0_1, %c0_2, %c0_3] : memref<1x1x80x12xbf16, #tpu.memory_space<vmem>>, vector<1x1x64x12xbf16>
    %4 = vector.shape_cast %3 : vector<1x1x64x12xbf16> to vector<64x12xbf16>
    %c0_4 = arith.constant 0 : index
    %c0_5 = arith.constant 0 : index
    %c0_6 = arith.constant 0 : index
    %c0_7 = arith.constant 0 : index
    %5 = vector.load %arg4[%c0_4, %c0_5, %c0_6, %c0_7] : memref<1x3x12x128xbf16, #tpu.memory_space<vmem>>, vector<1x1x12x128xbf16>
    %6 = vector.shape_cast %5 : vector<1x1x12x128xbf16> to vector<12x128xbf16>
    %cst = arith.constant dense<0.000000e+00> : vector<64x128xf32>
    %7 = tpu.matmul %4, %6, %cst {dimension_numbers = #tpu.dot_dimension_numbers<[1], [0], [0], [1], [0, 0, 1, 1], [], []>} : vector<64x12xbf16>, vector<12x128xbf16>, vector<64x128xf32> -> vector<64x128xf32>
    %c0_8 = arith.constant 0 : index
    %c0_9 = arith.constant 0 : index
    %c8 = arith.constant 8 : index
    %c0_10 = arith.constant 0 : index
    %8 = vector.load %arg3[%c0_8, %c0_9, %c8, %c0_10] : memref<1x1x80x12xbf16, #tpu.memory_space<vmem>>, vector<1x1x64x12xbf16>
    %9 = vector.shape_cast %8 : vector<1x1x64x12xbf16> to vector<64x12xbf16>
    %c0_11 = arith.constant 0 : index
    %c1 = arith.constant 1 : index
    %c0_12 = arith.constant 0 : index
    %c0_13 = arith.constant 0 : index
    %10 = vector.load %arg4[%c0_11, %c1, %c0_12, %c0_13] : memref<1x3x12x128xbf16, #tpu.memory_space<vmem>>, vector<1x1x12x128xbf16>
    %11 = vector.shape_cast %10 : vector<1x1x12x128xbf16> to vector<12x128xbf16>
    %cst_14 = arith.constant dense<0.000000e+00> : vector<64x128xf32>
    %12 = tpu.matmul %9, %11, %cst_14 {dimension_numbers = #tpu.dot_dimension_numbers<[1], [0], [0], [1], [0, 0, 1, 1], [], []>} : vector<64x12xbf16>, vector<12x128xbf16>, vector<64x128xf32> -> vector<64x128xf32>
    %13 = arith.addf %7, %12 : vector<64x128xf32>
    %c0_15 = arith.constant 0 : index
    %c0_16 = arith.constant 0 : index
    %c16 = arith.constant 16 : index
    %c0_17 = arith.constant 0 : index
    %14 = vector.load %arg3[%c0_15, %c0_16, %c16, %c0_17] : memref<1x1x80x12xbf16, #tpu.memory_space<vmem>>, vector<1x1x64x12xbf16>
    %15 = vector.shape_cast %14 : vector<1x1x64x12xbf16> to vector<64x12xbf16>
    %c0_18 = arith.constant 0 : index
    %c2 = arith.constant 2 : index
    %c0_19 = arith.constant 0 : index
    %c0_20 = arith.constant 0 : index
    %16 = vector.load %arg4[%c0_18, %c2, %c0_19, %c0_20] : memref<1x3x12x128xbf16, #tpu.memory_space<vmem>>, vector<1x1x12x128xbf16>
    %17 = vector.shape_cast %16 : vector<1x1x12x128xbf16> to vector<12x128xbf16>
    %cst_21 = arith.constant dense<0.000000e+00> : vector<64x128xf32>
    %18 = tpu.matmul %15, %17, %cst_21 {dimension_numbers = #tpu.dot_dimension_numbers<[1], [0], [0], [1], [0, 0, 1, 1], [], []>} : vector<64x12xbf16>, vector<12x128xbf16>, vector<64x128xf32> -> vector<64x128xf32>
    %19 = arith.addf %13, %18 : vector<64x128xf32>
    %c0_22 = arith.constant 0 : index
    %c0_23 = arith.constant 0 : index
    %20 = vector.load %arg7[%c0_22, %c0_23] : memref<64x128xf32, #tpu.memory_space<vmem>>, vector<64x128xf32>
    %21 = arith.addf %20, %19 : vector<64x128xf32>
    %c0_24 = arith.constant 0 : index
    %c0_25 = arith.constant 0 : index
    %22 = vector.load %arg7[%c0_24, %c0_25] : memref<64x128xf32, #tpu.memory_space<vmem>>, vector<64x128xf32>
    tpu.vector_store %arg7[%c0_24, %c0_25], %21 {strides = array<i32>} : memref<64x128xf32, #tpu.memory_space<vmem>>, vector<64x128xf32>,
    %c2_i32 = arith.constant 2 : i32
    %23 = arith.cmpi eq, %arg2, %c2_i32 : i32
    %24 = arith.extui %23 : i1 to i32
    %c0_i32_26 = arith.constant 0 : i32
    %25 = arith.cmpi ne, %24, %c0_i32_26 : i32
    scf.if %25 {
      %c0_27 = arith.constant 0 : index
      %c0_28 = arith.constant 0 : index
      %26 = vector.load %arg7[%c0_27, %c0_28] : memref<64x128xf32, #tpu.memory_space<vmem>>, vector<64x128xf32>
      %c0_29 = arith.constant 0 : index
      %c0_30 = arith.constant 0 : index
      %27 = vector.load %arg5[%c0_29, %c0_30] : memref<1x128xf32, #tpu.memory_space<vmem>>, vector<1x128xf32>
      %28 = vector.broadcast %27 : vector<1x128xf32> to vector<64x128xf32>
      %29 = arith.addf %26, %28 : vector<64x128xf32>
      %cst_31 = arith.constant 0.000000e+00 : f32
      %30 = vector.broadcast %cst_31 : f32 to vector<64x128xf32>
      %31 = arith.maximumf %29, %30 : vector<64x128xf32>
      %c0_32 = arith.constant 0 : index
      %c0_33 = arith.constant 0 : index
      %c0_34 = arith.constant 0 : index
      %c0_35 = arith.constant 0 : index
      %32 = vector.load %arg6[%c0_32, %c0_33, %c0_34, %c0_35] : memref<1x1x64x128xf32, #tpu.memory_space<vmem>>, vector<1x1x64x128xf32>
      %33 = vector.shape_cast %32 : vector<1x1x64x128xf32> to vector<64x128xf32>
      %34 = vector.shape_cast %31 : vector<64x128xf32> to vector<1x1x64x128xf32>
      tpu.vector_store %arg6[%c0_32, %c0_33, %c0_34, %c0_35], %34 {strides = array<i32>} : memref<1x1x64x128xf32, #tpu.memory_space<vmem>>, vector<1x1x64x128xf32>,
    } else {
    }
    return
  }
  func.func @transform_0(%arg0: i32, %arg1: i32, %arg2: i32) -> (i32, i32, i32, i32) {
    %c1_i32 = arith.constant 1 : i32
    %0 = arith.muli %arg1, %c1_i32 : i32
    %1 = arith.addi %0, %arg2 : i32
    %c0_i32 = arith.constant 0 : i32
    %c0_i32_0 = arith.constant 0 : i32
    %c0_i32_1 = arith.constant 0 : i32
    return %arg0, %1, %c0_i32, %c0_i32_0 : i32, i32, i32, i32
  }
  func.func @transform_1(%arg0: i32, %arg1: i32, %arg2: i32) -> (i32, i32, i32, i32) {
    %c0_i32 = arith.constant 0 : i32
    %c0_i32_0 = arith.constant 0 : i32
    %c0_i32_1 = arith.constant 0 : i32
    %c0_i32_2 = arith.constant 0 : i32
    return %arg2, %c0_i32, %c0_i32_0, %c0_i32_1 : i32, i32, i32, i32
  }
  func.func @transform_2(%arg0: i32, %arg1: i32, %arg2: i32) -> (i32, i32) {
    %c0_i32 = arith.constant 0 : i32
    %c0_i32_0 = arith.constant 0 : i32
    %c0_i32_1 = arith.constant 0 : i32
    return %c0_i32, %c0_i32_0 : i32, i32
  }
  func.func @transform_3(%arg0: i32, %arg1: i32, %arg2: i32) -> (i32, i32, i32, i32) {
    %c0_i32 = arith.constant 0 : i32
    %c0_i32_0 = arith.constant 0 : i32
    %c0_i32_1 = arith.constant 0 : i32
    return %arg0, %arg1, %c0_i32, %c0_i32_0 : i32, i32, i32, i32
  }
}

</mosaic_0001>

<llo_original>
// kernel: tpu_custom_call.1
$region0: #{tpu_custom_call.1}
  #allocation0 [shape = 'u32[]', space=smem, size = 0x4, offset = 0x4, fixed_abs, tag = 'smem constant byte address 0x4 - core index']
  #allocation1 [shape = 'u32[144,128]{1,0:T(1,128)}', space=vmem, size = 0x12000, scoped, tag = 'internal scratch']
  #allocation2 [shape = 'f32[64,128]{1,0:T(8,128)}', space=vmem, size = 0x8000, scoped, tag = 'scratch operand']
  %s0 = inlined_call_operand.vmem [shape: bf16[2,10,80,12], index: 0, kind: input, shape index: {}]
  %s1 = inlined_call_operand.vmem [shape: bf16[3,3,12,128], index: 1, kind: input, shape index: {}]
  %s2 = inlined_call_operand.vmem [shape: f32[1,128], index: 2, kind: input, shape index: {}]
  %s3 = inlined_call_operand.hbm [shape: f32[2,8,64,128], index: 3, kind: output, shape index: {}]
  %s4 = sld [smem:[#allocation0]]
  $region53: #{tpu_custom_call.1} parent=0
    _
  %s6 = ssub.s32 1, %s4
  %s7 = scalar_select 0, %s6, %s4
  $region1: #{tpu_custom_call.1} parent=0
    #allocation3 [shape = 'u8[65536]{0}', space=vmem, size = 0x10000, scoped, tag = 'output window, operand 0']
    #allocation4 [shape = 's32[2]{0}', space=sflag, size = 0x8, scoped, tag = 'scoped memory for tpu_custom_call.1']
    %8 = vsyncpa [#allocation4], 0
    %s9 = scalar_lea.sflag [#allocation4], 1
    %10 = vsyncpa %s9, 0
    loop: start=0, step=1, limit=50
    $region2: #{tpu_custom_call.1} parent=1 // loop_pre_header
      _
    $region3: #{tpu_custom_call.1} parent=1 // loop_header
      %s12 = sphi 0, %s16
      %p13 = scmp.ge.s32.totalorder %s12, 50
      %s19 = sphi 0, %s38
      %s20 = sphi 0, %s34
      %s21 = sphi 0, %s30
      %s22 = sphi 0, %s19
      %s23 = sphi 0, %s20
      %s24 = sphi 0, %s21
      %s25 = sphi 0, %s22
      %s26 = sphi 0, %s23
      %s27 = sphi 0, %s24
      %s45 = sphi 0, %s47
      %s48 = sphi 0, %s45
      %s49 = sphi 0, %s48
      %s65 = sphi 0, %s49
      %s71 = sphi 0, %s73
      %s74 = sphi 0, %s71
      %s75 = sphi 0, %s74
      %s91 = sphi 0, %s75
      %s95 = sphi 0, %s95
      %s97 = sphi 0, %s95
      %s98 = sphi 0, %s97
      %s112 = sphi 0, %s98
      %s120 = sphi 0, %s122
      %s123 = sphi 0, %s120
      %s124 = sphi 0, %s123
      %s140 = sphi 0, %s124
    $region4: #{tpu_custom_call.1} parent=1 // loop_header_branch
      %15 = sbr.rel (%p13) target = $region8
    $region5: #{tpu_custom_call.1} parent=1 // loop_body
      %s17 = ssub.s32 %s12, 1
      %s18 = ssub.s32 %s12, 2
      %s28 = sadd.s32 1, %s21
      %p29 = scmp.ge.s32.totalorder %s28, 3
      %s30 = scalar_select %p29, 0, %s28
      %s31 = sadd.s32 1, %s20
      %s32 = scalar_select %p29, %s31, %s20
      %p33 = scmp.ge.s32.totalorder %s32, 8
      %s34 = scalar_select %p33, 0, %s32
      %s35 = sadd.s32 1, %s19
      %s36 = scalar_select %p33, %s35, %s19
      %p37 = scmp.ge.s32.totalorder %s36, 2
      %s38 = scalar_select %p37, 0, %s36
      %s39 = sadd.s32 %s20, %s21
      %s40 = sadd.s32 %s34, %s30
      %s41 = ssub.s32 %s19, %s38
      %s42 = ssub.s32 %s39, %s40
      %s43 = sor.u32 %s41, %s42
      %p44 = scmp.eq.s32.totalorder %s43, 0
      %s46 = sadd.s32 %s45, 1
      %s47 = scalar_select %p44, %s45, %s46
      %p50 = pneg %p44
      %p51 = scmp.eq.s32.totalorder %s12, 47
      %p52 = por %p50, %p51
      %p53 = scmp.ne.s32.totalorder %s45, %s48
      %p54 = scmp.eq.s32.totalorder %s12, 0
      %p55 = por %p53, %p54
      %p56 = scmp.ne.s32.totalorder %s45, %s48
      %p57 = scmp.eq.s32.totalorder %s17, 47
      %p58 = por %p56, %p57
      %p59 = scmp.ne.s32.totalorder %s48, %s49
      %p60 = scmp.eq.s32.totalorder %s17, 0
      %p61 = por %p59, %p60
      %p62 = scmp.ne.s32.totalorder %s48, %s49
      %p63 = scmp.eq.s32.totalorder %s18, 47
      %p64 = por %p62, %p63
      %p66 = scmp.ne.s32.totalorder %s49, %s65
      %p67 = scmp.eq.s32.totalorder %s18, 0
      %p68 = por %p66, %p67
      %s69 = ssub.s32 %s21, %s30
      %p70 = scmp.eq.s32.totalorder %s69, 0
      %s72 = sadd.s32 %s71, 1
      %s73 = scalar_select %p70, %s71, %s72
      %p76 = pneg %p70
      %p77 = scmp.eq.s32.totalorder %s12, 47
      %p78 = por %p76, %p77
      %p79 = scmp.ne.s32.totalorder %s71, %s74
      %p80 = scmp.eq.s32.totalorder %s12, 0
      %p81 = por %p79, %p80
      %p82 = scmp.ne.s32.totalorder %s71, %s74
      %p83 = scmp.eq.s32.totalorder %s17, 47
      %p84 = por %p82, %p83
      %p85 = scmp.ne.s32.totalorder %s74, %s75
      %p86 = scmp.eq.s32.totalorder %s17, 0
      %p87 = por %p85, %p86
      %p88 = scmp.ne.s32.totalorder %s74, %s75
      %p89 = scmp.eq.s32.totalorder %s18, 47
      %p90 = por %p88, %p89
      %p92 = scmp.ne.s32.totalorder %s75, %s91
      %p93 = scmp.eq.s32.totalorder %s18, 0
      %p94 = por %p92, %p93
      %s96 = sadd.s32 %s95, 1
      %p99 = scmp.eq.s32.totalorder %s12, 47
      %p100 = scmp.ne.s32.totalorder %s95, %s97
      %p101 = scmp.eq.s32.totalorder %s12, 0
      %p102 = por %p100, %p101
      %p103 = scmp.ne.s32.totalorder %s95, %s97
      %p104 = scmp.eq.s32.totalorder %s17, 47
      %p105 = por %p103, %p104
      %p106 = scmp.ne.s32.totalorder %s97, %s98
      %p107 = scmp.eq.s32.totalorder %s17, 0
      %p108 = por %p106, %p107
      %p109 = scmp.ne.s32.totalorder %s97, %s98
      %p110 = scmp.eq.s32.totalorder %s18, 47
      %p111 = por %p109, %p110
      %p113 = scmp.ne.s32.totalorder %s98, %s112
      %p114 = scmp.eq.s32.totalorder %s18, 0
      %p115 = por %p113, %p114
      %s116 = ssub.s32 %s19, %s38
      %s117 = ssub.s32 %s20, %s34
      %s118 = sor.u32 %s116, %s117
      %p119 = scmp.eq.s32.totalorder %s118, 0
      %s121 = sadd.s32 %s120, 1
      %s122 = scalar_select %p119, %s120, %s121
      %p125 = pneg %p119
      %p126 = scmp.eq.s32.totalorder %s12, 47
      %p127 = por %p125, %p126
      %p128 = scmp.ne.s32.totalorder %s120, %s123
      %p129 = scmp.eq.s32.totalorder %s12, 0
      %p130 = por %p128, %p129
      %p131 = scmp.ne.s32.totalorder %s120, %s123
      %p132 = scmp.eq.s32.totalorder %s17, 47
      %p133 = por %p131, %p132
      %p134 = scmp.ne.s32.totalorder %s123, %s124
      %p135 = scmp.eq.s32.totalorder %s17, 0
      %p136 = por %p134, %p135
      %p137 = scmp.ne.s32.totalorder %s123, %s124
      %p138 = scmp.eq.s32.totalorder %s18, 47
      %p139 = por %p137, %p138
      %p141 = scmp.ne.s32.totalorder %s124, %s140
      %p142 = scmp.eq.s32.totalorder %s18, 0
      %p143 = por %p141, %p142
      %p144 = scmp.le.s32.totalorder 1, %s12
      %p145 = scmp.lt.s32.totalorder %s12, 49
      %p146 = pnand %p144, %p145
      %p147 = pneg %p146
      // Predicated region
      $region9: #{tpu_custom_call.1} parent=5 // pred_check
        _
      $region10: #{tpu_custom_call.1} parent=5 // pred_check_branch
        %149 = sbr.rel (%p146) target = $region12
      $region11: #{tpu_custom_call.1} parent=5 // pred_region
        %s150 = ssub.s32 %s12, 1
        // Predicated region
        $region13: #{tpu_custom_call.1} parent=11 // pred_check
          %p151 = pneg %p108
        $region14: #{tpu_custom_call.1} parent=11 // pred_check_branch
          %153 = sbr.rel (%p151) target = $region16
        $region15: #{tpu_custom_call.1} parent=11 // pred_region
          _
        $region16: #{tpu_custom_call.1} parent=11 // pred_fallthru
          _
      $region12: #{tpu_custom_call.1} parent=5 // pred_fallthru
        _
      %p154 = scmp.lt.s32.totalorder %s12, 48
      // Predicated region
      $region17: #{tpu_custom_call.1} parent=5 // pred_check
        %p155 = pneg %p154
      $region18: #{tpu_custom_call.1} parent=5 // pred_check_branch
        %157 = sbr.rel (%p155) target = $region20
      $region19: #{tpu_custom_call.1} parent=5 // pred_region
        // Predicated region
        $region21: #{tpu_custom_call.1} parent=19 // pred_check
          %p158 = pneg %p55
        $region22: #{tpu_custom_call.1} parent=19 // pred_check_branch
          %160 = sbr.rel (%p158) target = $region24
        $region23: #{tpu_custom_call.1} parent=19 // pred_region
          %s161 = sadd.s32 %s20, %s21
          %p162 = scmp.lt.s32.totalorder %s19, 1
          %s163 = scalar_select %p162, %s19, 1
          %p164 = scmp.lt.s32.totalorder %s161, 9
          %s165 = scalar_select %p164, %s161, 9
          %s166 = smul.addr %s165, 10
          %s167 = smul.addr %s163, 100
          %s168 = sadd.s32 %s166, %s167
          %s169 = smul.addr %s168, 4
          %s170 = scalar_lea.vmem %s0, %s169
          %s171 = sadd.s32 %s20, %s21
        $region24: #{tpu_custom_call.1} parent=19 // pred_fallthru
          _
        // Predicated region
        $region25: #{tpu_custom_call.1} parent=19 // pred_check
          %p172 = pneg %p81
        $region26: #{tpu_custom_call.1} parent=19 // pred_check_branch
          %174 = sbr.rel (%p172) target = $region28
        $region27: #{tpu_custom_call.1} parent=19 // pred_region
          %p175 = scmp.lt.s32.totalorder %s21, 2
          %s176 = scalar_select %p175, %s21, 2
          %s177 = smul.addr %s176, 6
          %s178 = smul.addr %s177, 4
          %s179 = scalar_lea.vmem %s1, %s178
        $region28: #{tpu_custom_call.1} parent=19 // pred_fallthru
          _
      $region20: #{tpu_custom_call.1} parent=5 // pred_fallthru
        _
      %p180 = scmp.le.s32.totalorder 1, %s12
      %p181 = scmp.lt.s32.totalorder %s12, 49
      %p182 = pnand %p180, %p181
      %p183 = pneg %p182
      // Predicated region
      $region29: #{tpu_custom_call.1} parent=5 // pred_check
        _
      $region30: #{tpu_custom_call.1} parent=5 // pred_check_branch
        %185 = sbr.rel (%p182) target = $region32
      $region31: #{tpu_custom_call.1} parent=5 // pred_region
        %s186 = ssub.s32 %s12, 1
        %s187 = sadd.s32 %s23, %s24
        %p188 = scmp.lt.s32.totalorder %s22, 1
        %s189 = scalar_select %p188, %s22, 1
        %p190 = scmp.lt.s32.totalorder %s187, 9
        %s191 = scalar_select %p190, %s187, 9
        %s192 = smul.addr %s191, 10
        %s193 = smul.addr %s189, 100
        %s194 = sadd.s32 %s192, %s193
        %s195 = smul.addr %s194, 4
        %s196 = scalar_lea.vmem %s0, %s195
        %p197 = pneg %p61
        %p198 = pneg %p58
        %p199 = scmp.lt.s32.totalorder %s24, 2
        %s200 = scalar_select %p199, %s24, 2
        %s201 = smul.addr %s200, 6
        %s202 = smul.addr %s201, 4
        %s203 = scalar_lea.vmem %s1, %s202
        %p204 = pneg %p87
        %p205 = pneg %p84
        %p206 = pneg %p108
        %p207 = pneg %p105
        %p208 = pneg %p136
        %p209 = pneg %p133
        %s210 = sand.u32 %s123, 1
        %s211 = scalar_lea.sflag [#allocation4], %s210
        %s212 = sand.u32 %s123, 1
        %s213 = smul.addr %s212, 64
        %s214 = scalar_lea.vmem [#allocation3], %s213
        %s215 = sadd.s32 %s23, %s24
        %p216 = scmp.lt.s32.totalorder %s22, 1
        %s217 = scalar_select %p216, %s22, 1
        %p218 = scmp.lt.s32.totalorder %s215, 9
        %s219 = scalar_select %p218, %s215, 9
        %s220 = smul.addr %s219, 10
        %s221 = smul.addr %s217, 100
        %s222 = sadd.s32 %s220, %s221
        %s223 = smul.addr %s222, 4
        %s224 = scalar_lea.vmem %s0, %s223
        %s225 = sadd.s32 %s23, %s24
        %p226 = scmp.lt.s32.totalorder %s24, 2
        %s227 = scalar_select %p226, %s24, 2
        %s228 = smul.addr %s227, 6
        %s229 = smul.addr %s228, 4
        %s230 = scalar_lea.vmem %s1, %s229
        %p232 = scmp.eq.s32.totalorder %s24, 0
        // Predicated region
        $region33: #{tpu_custom_call.1} parent=31 // pred_check
          %p233 = pneg %p232
        $region34: #{tpu_custom_call.1} parent=31 // pred_check_branch
          %235 = sbr.rel (%p233) target = $region36
        $region35: #{tpu_custom_call.1} parent=31 // pred_region
          %236 = vst [vmem:[#allocation2] sm:$0xff] 0.0
          %237 = vst [vmem:[#allocation2 + $0x8] sm:$0xff] 0.0
          %238 = vst [vmem:[#allocation2 + $0x10] sm:$0xff] 0.0
          %239 = vst [vmem:[#allocation2 + $0x18] sm:$0xff] 0.0
          %240 = vst [vmem:[#allocation2 + $0x20] sm:$0xff] 0.0
          %241 = vst [vmem:[#allocation2 + $0x28] sm:$0xff] 0.0
          %242 = vst [vmem:[#allocation2 + $0x30] sm:$0xff] 0.0
          %243 = vst [vmem:[#allocation2 + $0x38] sm:$0xff] 0.0
        $region36: #{tpu_custom_call.1} parent=31 // pred_fallthru
          _
        %v244 = vld [vmem:[%s224] sm:$0xf]
        %v245 = vld [vmem:[%s224 + $0x4] sm:$0xf]
        %v246 = vld [vmem:[%s224 + $0x8] sm:$0xf]
        %v247 = vld [vmem:[%s224 + $0xc] sm:$0xf]
        %v248 = vld [vmem:[%s224 + $0x10] sm:$0xf]
        %v249 = vld [vmem:[%s224 + $0x14] sm:$0xf]
        %v250 = vld [vmem:[%s224 + $0x18] sm:$0xf]
        %v251 = vld [vmem:[%s224 + $0x1c] sm:$0xf]
        %v252 = vld [vmem:[%s230] sm:$0xf]
        %v253 = vld [vmem:[%s230 + $0x4] sm:$0x3]
        %v254 = vld [vmem:[%s224 + $0x20] sm:$0xf]
        %s255 = scalar_lea.vmem %s230, 8
        %v256 = vld [vmem:[%s255] sm:$0xf]
        %v257 = vld [vmem:[%s255 + $0x4] sm:$0x3]
        %v266 = vunpack.c.l.b16 %v245
        %v267 = vunpack.c.l.b16 %v246
        %v268 = vunpack.c.l.b16 %v247
        %v269 = vunpack.c.l.b16 %v248
        %v270 = vunpack.c.l.b16 %v249
        %v271 = vunpack.c.l.b16 %v250
        %v272 = vunpack.c.l.b16 %v251
        %v273 = vunpack.c.l.b16 %v254
        %v274 = vpack.c.b16 %v267, %v266
        %v275 = vpack.c.b16 %v269, %v268
        %v276 = vpack.c.b16 %v271, %v270
        %v277 = vpack.c.b16 %v273, %v272
        %v280 = vunpack.c.l.b16 %v256
        %v281 = vunpack.c.l.b16 %v257
        %v282 = vpack.c.b16 %v281, %v280
        %vm283 = vcmask 97280
        %v285 = vsel %vm283, %v274, 0
        %v288 = vsel %vm283, %v275, 0
        %v291 = vsel %vm283, %v276, 0
        %v294 = vsel %vm283, %v277, 0
        %vm296 = vcmask 1045504
        %v298 = vsel %vm296, %v282, 0
        %300 = vmatprep.subr.bf16.mxu0 0
        %301 = vmatpush1.bf16.msra.mxu0 %v298
        %302 = vmatprep.subr.bf16.mxu0 0
        %303 = vmatpush1.bf16.msra.mxu0 0
        %304 = vmatprep.subr.bf16.mxu0 0
        %305 = vmatpush1.bf16.msra.mxu0 0
        %306 = vmatprep.subr.bf16.mxu0 0
        %307 = vmatpush1.bf16.msra.mxu0 0
        %308 = vmatprep.subr.bf16.mxu0 0
        %309 = vmatpush1.bf16.msra.mxu0 0
        %310 = vmatprep.subr.bf16.mxu0 0
        %311 = vmatpush1.bf16.msra.mxu0 0
        %312 = vmatprep.subr.bf16.mxu0 0
        %313 = vmatpush1.bf16.msra.mxu0 0
        %314 = vmatprep.subr.bf16.mxu0 0
        %315 = vmatpush1.bf16.msra.mxu0 0
        %316 = vmatprep.subr.bf16.mxu0 0
        %317 = vmatpush1.bf16.msra.mxu0 0
        %318 = vmatprep.subr.bf16.mxu0 0
        %319 = vmatpush1.bf16.msra.mxu0 0
        %320 = vmatprep.subr.bf16.mxu0 0
        %321 = vmatpush1.bf16.msra.mxu0 0
        %322 = vmatprep.subr.bf16.mxu0 0
        %323 = vmatpush1.bf16.msra.mxu0 0
        %324 = vmatprep.subr.bf16.mxu0 0
        %325 = vmatpush1.bf16.msra.mxu0 0
        %326 = vmatprep.subr.bf16.mxu0 0
        %327 = vmatpush1.bf16.msra.mxu0 0
        %328 = vmatprep.subr.bf16.mxu0 0
        %329 = vmatpush1.bf16.msra.mxu0 0
        %330 = vmatprep.subr.bf16.mxu0 0
        %331 = vmatpush1.bf16.msra.mxu0 0
        %332 = vmatprep.mubr.bf16.mxu0 0
        %333 = vmatmul.mubr.bf16.gmra.mrb[0].mxu0 %v285
        %v334 = vpop.f32.mrb[0].mxu0
        %v335 = vadd.f32 0.0, %v334
        %v336 = vpop.f32.mrb[0].mxu0
        %v337 = vpop.f32.mrb[0].mxu0
        %v338 = vadd.f32 0.0, %v337
        %v339 = vpop.f32.mrb[0].mxu0
        %340 = vmatprep.mubr.bf16.mxu0 0
        %341 = vmatmul.mubr.bf16.gmra.mrb[0].mxu0 %v288
        %v342 = vpop.f32.mrb[0].mxu0
        %v343 = vadd.f32 0.0, %v342
        %v344 = vpop.f32.mrb[0].mxu0
        %v345 = vpop.f32.mrb[0].mxu0
        %v346 = vadd.f32 0.0, %v345
        %v347 = vpop.f32.mrb[0].mxu0
        %348 = vmatprep.mubr.bf16.mxu0 0
        %349 = vmatmul.mubr.bf16.gmra.mrb[0].mxu0 %v291
        %v350 = vpop.f32.mrb[0].mxu0
        %v351 = vadd.f32 0.0, %v350
        %v352 = vpop.f32.mrb[0].mxu0
        %v353 = vpop.f32.mrb[0].mxu0
        %v354 = vadd.f32 0.0, %v353
        %v355 = vpop.f32.mrb[0].mxu0
        %356 = vmatprep.mubr.bf16.mxu0 0
        %357 = vmatmul.mubr.bf16.gmra.mrb[0].mxu0 %v294
        %v358 = vpop.f32.mrb[0].mxu0
        %v359 = vadd.f32 0.0, %v358
        %v360 = vpop.f32.mrb[0].mxu0
        %v361 = vpop.f32.mrb[0].mxu0
        %v362 = vadd.f32 0.0, %v361
        %v363 = vpop.f32.mrb[0].mxu0
        %364 = vdwg.mxu0
        %v366 = vunpack.c.l.b16 %v244
        %v367 = vpack.c.b16 %v266, %v366
        %v368 = vpack.c.b16 %v268, %v267
        %v369 = vpack.c.b16 %v270, %v269
        %v370 = vpack.c.b16 %v272, %v271
        %v373 = vunpack.c.l.b16 %v252
        %v374 = vunpack.c.l.b16 %v253
        %v375 = vpack.c.b16 %v374, %v373
        %v377 = vsel %vm283, %v367, 0
        %v380 = vsel %vm283, %v368, 0
        %v383 = vsel %vm283, %v369, 0
        %v386 = vsel %vm283, %v370, 0
        %v389 = vsel %vm296, %v375, 0
        %391 = vmatprep.subr.bf16.mxu0 0
        %392 = vmatpush1.bf16.msra.mxu0 %v389
        %393 = vmatprep.subr.bf16.mxu0 0
        %394 = vmatpush1.bf16.msra.mxu0 0
        %395 = vmatprep.subr.bf16.mxu0 0
        %396 = vmatpush1.bf16.msra.mxu0 0
        %397 = vmatprep.subr.bf16.mxu0 0
        %398 = vmatpush1.bf16.msra.mxu0 0
        %399 = vmatprep.subr.bf16.mxu0 0
        %400 = vmatpush1.bf16.msra.mxu0 0
        %401 = vmatprep.subr.bf16.mxu0 0
        %402 = vmatpush1.bf16.msra.mxu0 0
        %403 = vmatprep.subr.bf16.mxu0 0
        %404 = vmatpush1.bf16.msra.mxu0 0
        %405 = vmatprep.subr.bf16.mxu0 0
        %406 = vmatpush1.bf16.msra.mxu0 0
        %407 = vmatprep.subr.bf16.mxu0 0
        %408 = vmatpush1.bf16.msra.mxu0 0
        %409 = vmatprep.subr.bf16.mxu0 0
        %410 = vmatpush1.bf16.msra.mxu0 0
        %411 = vmatprep.subr.bf16.mxu0 0
        %412 = vmatpush1.bf16.msra.mxu0 0
        %413 = vmatprep.subr.bf16.mxu0 0
        %414 = vmatpush1.bf16.msra.mxu0 0
        %415 = vmatprep.subr.bf16.mxu0 0
        %416 = vmatpush1.bf16.msra.mxu0 0
        %417 = vmatprep.subr.bf16.mxu0 0
        %418 = vmatpush1.bf16.msra.mxu0 0
        %419 = vmatprep.subr.bf16.mxu0 0
        %420 = vmatpush1.bf16.msra.mxu0 0
        %421 = vmatprep.subr.bf16.mxu0 0
        %422 = vmatpush1.bf16.msra.mxu0 0
        %423 = vmatprep.mubr.bf16.mxu0 0
        %424 = vmatmul.mubr.bf16.gmra.mrb[0].mxu0 %v377
        %v425 = vpop.f32.mrb[0].mxu0
        %v426 = vadd.f32 %v335, %v425
        %v427 = vpop.f32.mrb[0].mxu0
        %v428 = vpop.f32.mrb[0].mxu0
        %v429 = vadd.f32 %v338, %v428
        %v430 = vpop.f32.mrb[0].mxu0
        %431 = vmatprep.mubr.bf16.mxu0 0
        %432 = vmatmul.mubr.bf16.gmra.mrb[0].mxu0 %v380
        %v433 = vpop.f32.mrb[0].mxu0
        %v434 = vadd.f32 %v343, %v433
        %v435 = vpop.f32.mrb[0].mxu0
        %v436 = vpop.f32.mrb[0].mxu0
        %v437 = vadd.f32 %v346, %v436
        %v438 = vpop.f32.mrb[0].mxu0
        %439 = vmatprep.mubr.bf16.mxu0 0
        %440 = vmatmul.mubr.bf16.gmra.mrb[0].mxu0 %v383
        %v441 = vpop.f32.mrb[0].mxu0
        %v442 = vadd.f32 %v351, %v441
        %v443 = vpop.f32.mrb[0].mxu0
        %v444 = vpop.f32.mrb[0].mxu0
        %v445 = vadd.f32 %v354, %v444
        %v446 = vpop.f32.mrb[0].mxu0
        %447 = vmatprep.mubr.bf16.mxu0 0
        %448 = vmatmul.mubr.bf16.gmra.mrb[0].mxu0 %v386
        %v449 = vpop.f32.mrb[0].mxu0
        %v450 = vadd.f32 %v359, %v449
        %v451 = vpop.f32.mrb[0].mxu0
        %v452 = vpop.f32.mrb[0].mxu0
        %v453 = vadd.f32 %v362, %v452
        %v454 = vpop.f32.mrb[0].mxu0
        %455 = vdwg.mxu0
        %v456 = vld [vmem:[%s224 + $0x8] sm:$0xf]
        %v457 = vld [vmem:[%s224 + $0xc] sm:$0xf]
        %v458 = vld [vmem:[%s224 + $0x10] sm:$0xf]
        %v459 = vld [vmem:[%s224 + $0x14] sm:$0xf]
        %v460 = vld [vmem:[%s224 + $0x18] sm:$0xf]
        %v461 = vld [vmem:[%s224 + $0x1c] sm:$0xf]
        %v462 = vld [vmem:[%s224 + $0x20] sm:$0xf]
        %v463 = vld [vmem:[%s224 + $0x24] sm:$0xf]
        %s464 = scalar_lea.vmem %s230, 16
        %v465 = vld [vmem:[%s464] sm:$0xf]
        %v466 = vld [vmem:[%s464 + $0x4] sm:$0x3]
        %v475 = vunpack.c.l.b16 %v456
        %v476 = vunpack.c.l.b16 %v457
        %v477 = vunpack.c.l.b16 %v458
        %v478 = vunpack.c.l.b16 %v459
        %v479 = vunpack.c.l.b16 %v460
        %v480 = vunpack.c.l.b16 %v461
        %v481 = vunpack.c.l.b16 %v462
        %v482 = vunpack.c.l.b16 %v463
        %v483 = vpack.c.b16 %v476, %v475
        %v484 = vpack.c.b16 %v478, %v477
        %v485 = vpack.c.b16 %v480, %v479
        %v486 = vpack.c.b16 %v482, %v481
        %v489 = vunpack.c.l.b16 %v465
        %v490 = vunpack.c.l.b16 %v466
        %v491 = vpack.c.b16 %v490, %v489
        %v493 = vsel %vm283, %v483, 0
        %v496 = vsel %vm283, %v484, 0
        %v499 = vsel %vm283, %v485, 0
        %v502 = vsel %vm283, %v486, 0
        %v505 = vsel %vm296, %v491, 0
        %507 = vmatprep.subr.bf16.mxu0 0
        %508 = vmatpush1.bf16.msra.mxu0 %v505
        %509 = vmatprep.subr.bf16.mxu0 0
        %510 = vmatpush1.bf16.msra.mxu0 0
        %511 = vmatprep.subr.bf16.mxu0 0
        %512 = vmatpush1.bf16.msra.mxu0 0
        %513 = vmatprep.subr.bf16.mxu0 0
        %514 = vmatpush1.bf16.msra.mxu0 0
        %515 = vmatprep.subr.bf16.mxu0 0
        %516 = vmatpush1.bf16.msra.mxu0 0
        %517 = vmatprep.subr.bf16.mxu0 0
        %518 = vmatpush1.bf16.msra.mxu0 0
        %519 = vmatprep.subr.bf16.mxu0 0
        %520 = vmatpush1.bf16.msra.mxu0 0
        %521 = vmatprep.subr.bf16.mxu0 0
        %522 = vmatpush1.bf16.msra.mxu0 0
        %523 = vmatprep.subr.bf16.mxu0 0
        %524 = vmatpush1.bf16.msra.mxu0 0
        %525 = vmatprep.subr.bf16.mxu0 0
        %526 = vmatpush1.bf16.msra.mxu0 0
        %527 = vmatprep.subr.bf16.mxu0 0
        %528 = vmatpush1.bf16.msra.mxu0 0
        %529 = vmatprep.subr.bf16.mxu0 0
        %530 = vmatpush1.bf16.msra.mxu0 0
        %531 = vmatprep.subr.bf16.mxu0 0
        %532 = vmatpush1.bf16.msra.mxu0 0
        %533 = vmatprep.subr.bf16.mxu0 0
        %534 = vmatpush1.bf16.msra.mxu0 0
        %535 = vmatprep.subr.bf16.mxu0 0
        %536 = vmatpush1.bf16.msra.mxu0 0
        %537 = vmatprep.subr.bf16.mxu0 0
        %538 = vmatpush1.bf16.msra.mxu0 0
        %539 = vmatprep.mubr.bf16.mxu0 0
        %540 = vmatmul.mubr.bf16.gmra.mrb[0].mxu0 %v493
        %v541 = vpop.f32.mrb[0].mxu0
        %v542 = vadd.f32 0.0, %v541
        %v543 = vpop.f32.mrb[0].mxu0
        %v544 = vpop.f32.mrb[0].mxu0
        %v545 = vadd.f32 0.0, %v544
        %v546 = vpop.f32.mrb[0].mxu0
        %547 = vmatprep.mubr.bf16.mxu0 0
        %548 = vmatmul.mubr.bf16.gmra.mrb[0].mxu0 %v496
        %v549 = vpop.f32.mrb[0].mxu0
        %v550 = vadd.f32 0.0, %v549
        %v551 = vpop.f32.mrb[0].mxu0
        %v552 = vpop.f32.mrb[0].mxu0
        %v553 = vadd.f32 0.0, %v552
        %v554 = vpop.f32.mrb[0].mxu0
        %555 = vmatprep.mubr.bf16.mxu0 0
        %556 = vmatmul.mubr.bf16.gmra.mrb[0].mxu0 %v499
        %v557 = vpop.f32.mrb[0].mxu0
        %v558 = vadd.f32 0.0, %v557
        %v559 = vpop.f32.mrb[0].mxu0
        %v560 = vpop.f32.mrb[0].mxu0
        %v561 = vadd.f32 0.0, %v560
        %v562 = vpop.f32.mrb[0].mxu0
        %563 = vmatprep.mubr.bf16.mxu0 0
        %564 = vmatmul.mubr.bf16.gmra.mrb[0].mxu0 %v502
        %v565 = vpop.f32.mrb[0].mxu0
        %v566 = vadd.f32 0.0, %v565
        %v567 = vpop.f32.mrb[0].mxu0
        %v568 = vpop.f32.mrb[0].mxu0
        %v569 = vadd.f32 0.0, %v568
        %v570 = vpop.f32.mrb[0].mxu0
        %571 = vdwg.mxu0
        %v572 = vadd.f32 %v426, %v542
        %v573 = vadd.f32 %v429, %v545
        %v574 = vadd.f32 %v434, %v550
        %v575 = vadd.f32 %v437, %v553
        %v576 = vadd.f32 %v442, %v558
        %v577 = vadd.f32 %v445, %v561
        %v578 = vadd.f32 %v450, %v566
        %v579 = vadd.f32 %v453, %v569
        %v580 = vld [vmem:[#allocation2] sm:$0xff]
        %v581 = vld [vmem:[#allocation2 + $0x8] sm:$0xff]
        %v582 = vld [vmem:[#allocation2 + $0x10] sm:$0xff]
        %v583 = vld [vmem:[#allocation2 + $0x18] sm:$0xff]
        %v584 = vld [vmem:[#allocation2 + $0x20] sm:$0xff]
        %v585 = vld [vmem:[#allocation2 + $0x28] sm:$0xff]
        %v586 = vld [vmem:[#allocation2 + $0x30] sm:$0xff]
        %v587 = vld [vmem:[#allocation2 + $0x38] sm:$0xff]
        %v588 = vadd.f32 %v580, %v572
        %v589 = vadd.f32 %v581, %v573
        %v590 = vadd.f32 %v582, %v574
        %v591 = vadd.f32 %v583, %v575
        %v592 = vadd.f32 %v584, %v576
        %v593 = vadd.f32 %v585, %v577
        %v594 = vadd.f32 %v586, %v578
        %v595 = vadd.f32 %v587, %v579
        %596 = vst [vmem:[#allocation2] sm:$0xff] %v588
        %597 = vst [vmem:[#allocation2 + $0x8] sm:$0xff] %v589
        %598 = vst [vmem:[#allocation2 + $0x10] sm:$0xff] %v590
        %599 = vst [vmem:[#allocation2 + $0x18] sm:$0xff] %v591
        %600 = vst [vmem:[#allocation2 + $0x20] sm:$0xff] %v592
        %601 = vst [vmem:[#allocation2 + $0x28] sm:$0xff] %v593
        %602 = vst [vmem:[#allocation2 + $0x30] sm:$0xff] %v594
        %603 = vst [vmem:[#allocation2 + $0x38] sm:$0xff] %v595
        %p604 = scmp.eq.s32.totalorder %s24, 2
        // Predicated region
        $region37: #{tpu_custom_call.1} parent=31 // pred_check
          %p605 = pneg %p604
        $region38: #{tpu_custom_call.1} parent=31 // pred_check_branch
          %607 = sbr.rel (%p605) target = $region40
        $region39: #{tpu_custom_call.1} parent=31 // pred_region
          %v608 = vld [vmem:[#allocation2] sm:$0xff]
          %v609 = vld [vmem:[#allocation2 + $0x8] sm:$0xff]
          %v610 = vld [vmem:[#allocation2 + $0x10] sm:$0xff]
          %v611 = vld [vmem:[#allocation2 + $0x18] sm:$0xff]
          %v612 = vld [vmem:[#allocation2 + $0x20] sm:$0xff]
          %v613 = vld [vmem:[#allocation2 + $0x28] sm:$0xff]
          %v614 = vld [vmem:[#allocation2 + $0x30] sm:$0xff]
          %v615 = vld [vmem:[#allocation2 + $0x38] sm:$0xff]
          %v616 = vld [vmem:[%s2] sm:$0x1]
          %v618 = vlaneseq
          %v619 = vshrl.u32 %v618, 7
          %v620 = vsub.s32 0, %v619
          %v621 = vrot.slane %v616, %v620
          %v623 = vadd.f32 %v608, %v621
          %v624 = vadd.f32 %v609, %v621
          %v625 = vadd.f32 %v610, %v621
          %v626 = vadd.f32 %v611, %v621
          %v627 = vadd.f32 %v612, %v621
          %v628 = vadd.f32 %v613, %v621
          %v629 = vadd.f32 %v614, %v621
          %v630 = vadd.f32 %v615, %v621
          %v631 = vmax.f32 %v623, 0.0
          %v632 = vmax.f32 %v624, 0.0
          %v633 = vmax.f32 %v625, 0.0
          %v634 = vmax.f32 %v626, 0.0
          %v635 = vmax.f32 %v627, 0.0
          %v636 = vmax.f32 %v628, 0.0
          %v637 = vmax.f32 %v629, 0.0
          %v638 = vmax.f32 %v630, 0.0
          %639 = vst [vmem:[%s214] sm:$0xff] %v631
          %640 = vst [vmem:[%s214 + $0x8] sm:$0xff] %v632
          %641 = vst [vmem:[%s214 + $0x10] sm:$0xff] %v633
          %642 = vst [vmem:[%s214 + $0x18] sm:$0xff] %v634
          %643 = vst [vmem:[%s214 + $0x20] sm:$0xff] %v635
          %644 = vst [vmem:[%s214 + $0x28] sm:$0xff] %v636
          %645 = vst [vmem:[%s214 + $0x30] sm:$0xff] %v637
          %646 = vst [vmem:[%s214 + $0x38] sm:$0xff] %v638
        $region40: #{tpu_custom_call.1} parent=31 // pred_fallthru
          _
        %s647 = sand.u32 %s123, 1
        %s648 = scalar_lea.sflag [#allocation4], %s647
        %s649 = sand.u32 %s123, 1
        %s650 = smul.addr %s649, 64
        %s651 = scalar_lea.vmem [#allocation3], %s650
        // Predicated region
        $region41: #{tpu_custom_call.1} parent=31 // pred_check
          %p652 = pneg %p133
        $region42: #{tpu_custom_call.1} parent=31 // pred_check_branch
          %654 = sbr.rel (%p652) target = $region44
        $region43: #{tpu_custom_call.1} parent=31 // pred_region
          %s656 = ssub.s32 1024, 1024
          %657 = vsyncadd %s648, %s656
          %s658 = smul.addr %s23, 8
          %s659 = smul.addr %s22, 64
          %s660 = sadd.s32 %s658, %s659
          %s661 = smul.addr %s660, 128
          %s662 = scalar_lea.hbm %s3, %s661
          %s663 = sshll.u32 %s651, 4
          %s664 = int_to_ptr.vmem [resolvable:$true] %s663
          %669 = dma.vmem_to_hbm [thread:$0]  %s664, 1024, %s662, %s648, 128, 128, 8
        $region44: #{tpu_custom_call.1} parent=31 // pred_fallthru
          _
      $region32: #{tpu_custom_call.1} parent=5 // pred_fallthru
        _
      %p670 = scmp.le.s32.totalorder 2, %s12
      // Predicated region
      $region45: #{tpu_custom_call.1} parent=5 // pred_check
        %p671 = pneg %p670
      $region46: #{tpu_custom_call.1} parent=5 // pred_check_branch
        %673 = sbr.rel (%p671) target = $region48
      $region47: #{tpu_custom_call.1} parent=5 // pred_region
        %s674 = ssub.s32 %s12, 2
        // Predicated region
        $region49: #{tpu_custom_call.1} parent=47 // pred_check
          %p675 = pneg %p139
        $region50: #{tpu_custom_call.1} parent=47 // pred_check_branch
          %677 = sbr.rel (%p675) target = $region52
        $region51: #{tpu_custom_call.1} parent=47 // pred_region
          %s678 = sand.u32 %s124, 1
          %s679 = scalar_lea.sflag [#allocation4], %s678
          %s680 = sand.u32 %s124, 1
          %s681 = smul.addr %s680, 64
          %s682 = scalar_lea.vmem [#allocation3], %s681
          %683 = dma.done %s679, 1024
        $region52: #{tpu_custom_call.1} parent=47 // pred_fallthru
          _
      $region48: #{tpu_custom_call.1} parent=5 // pred_fallthru
        _
    $region6: #{tpu_custom_call.1} parent=1 // loop_footer
      %s16 = sadd.s32 1, %s12
    $region7: #{tpu_custom_call.1} parent=1 // loop_footer_branch
      %11 = sbr.rel target = $region3
    $region8: #{tpu_custom_call.1} parent=1 // loop_exit
      _
    %684 = vsyncpa [#allocation4], 1
    %s685 = scalar_lea.sflag [#allocation4], 1
    %686 = vsyncpa %s685, 1

</llo_original>
